<compile_context>
chip_gen: v7x
topology: tpu7x:2x2x1
jax: 0.10.0
libtpu: 0.0.40
codegen_flags: <defaults>
</compile_context>

<pallas_src>
import functools

import jax
import jax.numpy as jnp
from jax.experimental import pallas as pl
from jax.experimental.pallas import tpu as pltpu

HIDDEN = 128
SUB_B = 256  # in-kernel compute sub-tile (rows); keeps h (f32) within ~32 vregs


def _round_up(x, m):
    return ((x + m - 1) // m) * m


def _vmem_budget():
    """Generation-aware VMEM budget (bytes) for tile sizing + vmem_limit."""
    try:
        cap = pltpu.get_tpu_info().vmem_capacity_bytes  # v7x: 64 MiB, v5e/v6e: 128 MiB
    except Exception:
        cap = 64 * 1024 * 1024  # conservative (v7x-sized) fallback
    return max(32 * 1024 * 1024, min(int(cap * 0.6), 96 * 1024 * 1024))


def _pick_tile_b(B, fp_dim, *, vmem_budget, max_tile=4096, min_grid_steps=2):
    """Largest MXU-friendly (multiple of 128) batch tile that fits the VMEM budget,
    capped so the 1-D parallel grid keeps >= min_grid_steps steps (v7x: 2 TCs)."""
    b128 = _round_up(B, 128)
    tile = min(max_tile, b128)
    if b128 >= min_grid_steps * 128:
        tile = min(tile, _round_up(pl.cdiv(b128, min_grid_steps), 128))
    tile = max(128, (tile // 128) * 128)

    def need(t):
        return (2 * t * fp_dim * 4            # double-buffered x tiles (f32 input)
                + 2 * fp_dim * HIDDEN * 2     # resident w1 (bf16), counted x2
                + min(t, SUB_B) * HIDDEN * 4  # h sub-block (f32)
                + 2 * t * 4                   # double-buffered output column (f32)
                + 8 * HIDDEN * 4)             # b1 / w2 + slack

    while tile > 128 and need(tile) > vmem_budget:
        tile = max(128, ((tile // 2) // 128) * 128)
    return tile


def _classifier_head_kernel(x_ref, w1_ref, b1_ref, w2_ref, b2_ref, o_ref,
                            *, sub_b, n_sub):
    # Resident operands (constant index_maps -> DMA'd once, live in VMEM).
    w1 = w1_ref[...]          # [fp_dim, 128] bf16
    b1 = b1_ref[...]          # [1, 128]      f32
    w2 = w2_ref[...]          # [128, 1]      f32
    b2 = b2_ref[0]            # scalar        f32 (SMEM)

    def body(s, carry):
        r0 = pl.multiple_of(s * sub_b, sub_b)
        # Cast to bf16 in-kernel (no extra HBM pass); f32 accumulation on the MXU.
        x_blk = x_ref[pl.ds(r0, sub_b), :].astype(jnp.bfloat16)
        h = jnp.dot(x_blk, w1, preferred_element_type=jnp.float32)
        h = jnp.maximum(h + b1, 0.0)            # bias + ReLU
        # Dropout(p=0.2): identity at inference time.
        logit = jnp.dot(h, w2, preferred_element_type=jnp.float32) + b2
        # Numerically stable sigmoid on the EUP: 0.5 * (tanh(x/2) + 1).
        o_ref[pl.ds(r0, sub_b), :] = (
            0.5 * (jnp.tanh(0.5 * logit) + 1.0)).astype(o_ref.dtype)
        return carry

    jax.lax.fori_loop(0, n_sub, body, 0, unroll=True)


def prepare_params(w1, b1, w2, b2):
    """One-time conversion to kernel layouts (do at param load time, not per call)."""
    fp_dim, hidden = w1.shape
    w1_bf = jnp.asarray(w1, jnp.bfloat16)                      # [fp_dim, 128] bf16
    b1_r = jnp.asarray(b1, jnp.float32).reshape(1, hidden)     # [1, 128]
    w2_c = jnp.asarray(w2, jnp.float32).reshape(hidden, 1)     # [128, 1]
    b2_s = jnp.asarray(b2, jnp.float32).reshape(1)             # [1] (SMEM scalar)
    return w1_bf, b1_r, w2_c, b2_s


def classification_network_forward(x, w1_bf, b1, w2_col, b2, *, max_tile_b=4096):
    """Fused MLP head: sigmoid(relu(x @ w1 + b1) @ w2 + b2).

    x      : [B, fp_dim] float32 or bfloat16 (encoder output fp1)
    w1_bf  : [fp_dim, 128] bfloat16
    b1     : [1, 128] float32
    w2_col : [128, 1] float32
    b2     : [1] float32
    returns [B, 1] float32
    """
    B, fp_dim = x.shape
    hidden = w1_bf.shape[1]

    budget = _vmem_budget()
    tile_b = _pick_tile_b(B, fp_dim, vmem_budget=budget, max_tile=max_tile_b)
    num_tiles = pl.cdiv(B, tile_b)  # partial last block handled by the pipeline DMA

    sub_b = SUB_B if tile_b % SUB_B == 0 else 128
    sub_b = min(sub_b, tile_b)
    n_sub = tile_b // sub_b

    x_bytes = x.size * jnp.dtype(x.dtype).itemsize
    flops = 2 * B * fp_dim * hidden + 2 * B * hidden
    bytes_accessed = (x_bytes + w1_bf.size * 2 + b1.size * 4 + w2_col.size * 4
                      + 4 + B * 4)

    kernel = functools.partial(_classifier_head_kernel, sub_b=sub_b, n_sub=n_sub)

    out = pl.pallas_call(
        kernel,
        out_shape=jax.ShapeDtypeStruct((B, 1), jnp.float32),
        grid_spec=pltpu.PrefetchScalarGridSpec(
            num_scalar_prefetch=0,
            grid=(num_tiles,),
            in_specs=[
                pl.BlockSpec((tile_b, fp_dim), lambda i: (i, 0)),   # x tile (pipelined)
                pl.BlockSpec((fp_dim, hidden), lambda i: (0, 0)),   # w1 (resident)
                pl.BlockSpec((1, hidden), lambda i: (0, 0)),        # b1 (resident)
                pl.BlockSpec((hidden, 1), lambda i: (0, 0)),        # w2 col (resident)
                pl.BlockSpec(memory_space=pltpu.MemorySpace.SMEM),  # b2 scalar
            ],
            out_specs=pl.BlockSpec((tile_b, 1), lambda i: (i, 0)),  # [B, 1] output
        ),
        compiler_params=pltpu.CompilerParams(
            dimension_semantics=("parallel",),
            vmem_limit_bytes=budget,
        ),
        cost_estimate=pl.CostEstimate(
            flops=flops, transcendentals=B, bytes_accessed=bytes_accessed),
    )(x, w1_bf, b1, w2_col, b2)

    return out


def init_params(key, fp_dim, hidden=HIDDEN):
    """Deterministic parameter init (Kaiming-uniform-ish like nn.Linear defaults)."""
    k1, k2, k3, k4 = jax.random.split(key, 4)
    bound1 = 1.0 / jnp.sqrt(fp_dim)
    w1 = jax.random.uniform(k1, (fp_dim, hidden), jnp.float32, -bound1, bound1)
    b1 = jax.random.uniform(k2, (1, hidden), jnp.float32, -bound1, bound1)
    bound2 = 1.0 / jnp.sqrt(hidden)
    w2 = jax.random.uniform(k3, (hidden, 1), jnp.float32, -bound2, bound2)
    b2 = jax.random.uniform(k4, (1, 1), jnp.float32, -bound2, bound2)
    return w1, b1, w2, b2


def reference_forward(x, w1, b1, w2, b2):
    h = jnp.maximum(x @ w1 + b1, 0.0)
    return jax.nn.sigmoid(h @ w2 + b2)


if __name__ == "__main__":
    FP_DIM = 256

    key = jax.random.PRNGKey(0)
    kx, kp, kx2 = jax.random.split(key, 3)
    w1, b1, w2, b2 = init_params(kp, FP_DIM, HIDDEN)
    params = prepare_params(w1, b1, w2, b2)   # one-time layout/dtype prep

    # Small batch: single (partial) tile.
    B = 8
    x = jax.random.normal(kx, (B, FP_DIM), jnp.float32)   # encoder output fp1
    out = jax.block_until_ready(classification_network_forward(x, *params))
    ref = reference_forward(x, w1, b1, w2, b2)
    assert out.shape == (B, 1)
    assert jnp.allclose(out, ref, atol=1e-2, rtol=1e-2), float(jnp.max(jnp.abs(out - ref)))

    # Larger, non-divisible batch: exercises the multi-step cdiv grid, partial last
    # block, and in-kernel sub-tiling (no wrapper-side pad or cast).
    B2 = 600
    x2 = jax.random.normal(kx2, (B2, FP_DIM), jnp.float32)
    out2 = jax.block_until_ready(classification_network_forward(x2, *params))
    ref2 = reference_forward(x2, w1, b1, w2, b2)
    assert out2.shape == (B2, 1)
    assert jnp.allclose(out2, ref2, atol=1e-2, rtol=1e-2), float(jnp.max(jnp.abs(out2 - ref2)))

    print("KERNEL_OK")
</pallas_src>

<mosaic_0001>
module attributes {stable_mosaic.version = 11 : i64} {
  func.func @_classifier_head_kernel(%arg0: i32, %arg1: memref<128x256xf32, #tpu.memory_space<vmem>>, %arg2: memref<256x128xbf16, #tpu.memory_space<vmem>>, %arg3: memref<1x128xf32, #tpu.memory_space<vmem>>, %arg4: memref<128x1xf32, #tpu.memory_space<vmem>>, %arg5: memref<1xf32, #tpu.memory_space<smem>>, %arg6: memref<128x1xf32, #tpu.memory_space<vmem>>) attributes {dimension_semantics = [#tpu.dimension_semantics<parallel>], iteration_bounds = array<i64: 1>, scalar_prefetch = 0 : i64, scratch_operands = 0 : i64, tpu.core_type = #tpu.core_type<tc>, window_params = [{transform_indices = @transform_0, window_bounds = array<i64: 128, 256>}, {pipeline_mode = #tpu.pipeline_mode<synchronous>, transform_indices = @transform_1, window_bounds = array<i64: 256, 128>}, {pipeline_mode = #tpu.pipeline_mode<synchronous>, transform_indices = @transform_2, window_bounds = array<i64: 1, 128>}, {pipeline_mode = #tpu.pipeline_mode<synchronous>, transform_indices = @transform_3, window_bounds = array<i64: 128, 1>}, {transform_indices = @transform_4, window_bounds = array<i64: 1>}, {transform_indices = @transform_5, window_bounds = array<i64: 128, 1>}]} {
    %c0 = arith.constant 0 : index
    %c0_0 = arith.constant 0 : index
    %0 = vector.load %arg2[%c0, %c0_0] : memref<256x128xbf16, #tpu.memory_space<vmem>>, vector<256x128xbf16>
    %c0_1 = arith.constant 0 : index
    %c0_2 = arith.constant 0 : index
    %1 = vector.load %arg3[%c0_1, %c0_2] : memref<1x128xf32, #tpu.memory_space<vmem>>, vector<1x128xf32>
    %c0_3 = arith.constant 0 : index
    %c0_4 = arith.constant 0 : index
    %2 = vector.load %arg4[%c0_3, %c0_4] : memref<128x1xf32, #tpu.memory_space<vmem>>, vector<128x1xf32>
    %c0_5 = arith.constant 0 : index
    %3 = memref.load %arg5[%c0_5] : memref<1xf32, #tpu.memory_space<smem>>
    %c0_i32 = arith.constant 0 : i32
    %c128_i32 = arith.constant 128 : i32
    %4 = arith.muli %c0_i32, %c128_i32 : i32
    %5 = tpu.assume_multiple %4, 128 : i32
    %6 = arith.index_cast %5 : i32 to index
    %c0_6 = arith.constant 0 : index
    %7 = vector.load %arg1[%6, %c0_6] : memref<128x256xf32, #tpu.memory_space<vmem>>, vector<128x256xf32>
    %8 = arith.truncf %7 : vector<128x256xf32> to vector<128x256xbf16>
    %cst = arith.constant dense<0.000000e+00> : vector<128x128xf32>
    %9 = tpu.matmul %8, %0, %cst {dimension_numbers = #tpu.dot_dimension_numbers<[1], [0], [0], [1], [0, 0, 1, 1], [], []>} : vector<128x256xbf16>, vector<256x128xbf16>, vector<128x128xf32> -> vector<128x128xf32>
    %10 = vector.broadcast %1 : vector<1x128xf32> to vector<128x128xf32>
    %11 = arith.addf %9, %10 : vector<128x128xf32>
    %cst_7 = arith.constant 0.000000e+00 : f32
    %12 = vector.broadcast %cst_7 : f32 to vector<128x128xf32>
    %13 = arith.maximumf %11, %12 : vector<128x128xf32>
    %cst_8 = arith.constant dense<0.000000e+00> : vector<128x1xf32>
    %14 = tpu.matmul %13, %2, %cst_8 {dimension_numbers = #tpu.dot_dimension_numbers<[1], [0], [0], [1], [0, 0, 1, 1], [], []>} : vector<128x128xf32>, vector<128x1xf32>, vector<128x1xf32> -> vector<128x1xf32>
    %15 = vector.broadcast %3 : f32 to vector<128x1xf32>
    %16 = arith.addf %14, %15 : vector<128x1xf32>
    %cst_9 = arith.constant 5.000000e-01 : f32
    %17 = vector.broadcast %cst_9 : f32 to vector<128x1xf32>
    %18 = arith.mulf %17, %16 : vector<128x1xf32>
    %19 = math.tanh %18 : vector<128x1xf32>
    %cst_10 = arith.constant 1.000000e+00 : f32
    %20 = vector.broadcast %cst_10 : f32 to vector<128x1xf32>
    %21 = arith.addf %19, %20 : vector<128x1xf32>
    %cst_11 = arith.constant 5.000000e-01 : f32
    %22 = vector.broadcast %cst_11 : f32 to vector<128x1xf32>
    %23 = arith.mulf %22, %21 : vector<128x1xf32>
    %24 = arith.index_cast %5 : i32 to index
    %c0_12 = arith.constant 0 : index
    %25 = vector.load %arg6[%24, %c0_12] : memref<128x1xf32, #tpu.memory_space<vmem>>, vector<128x1xf32>
    tpu.vector_store %arg6[%24, %c0_12], %23 {strides = array<i32>} : memref<128x1xf32, #tpu.memory_space<vmem>>, vector<128x1xf32>,
    %c1_i32 = arith.constant 1 : i32
    return
  }
  func.func @transform_0(%arg0: i32) -> (i32, i32) {
    %c0_i32 = arith.constant 0 : i32
    %c0_i32_0 = arith.constant 0 : i32
    return %arg0, %c0_i32 : i32, i32
  }
  func.func @transform_1(%arg0: i32) -> (i32, i32) {
    %c0_i32 = arith.constant 0 : i32
    %c0_i32_0 = arith.constant 0 : i32
    %c0_i32_1 = arith.constant 0 : i32
    return %c0_i32, %c0_i32_0 : i32, i32
  }
  func.func @transform_2(%arg0: i32) -> (i32, i32) {
    %c0_i32 = arith.constant 0 : i32
    %c0_i32_0 = arith.constant 0 : i32
    %c0_i32_1 = arith.constant 0 : i32
    return %c0_i32, %c0_i32_0 : i32, i32
  }
  func.func @transform_3(%arg0: i32) -> (i32, i32) {
    %c0_i32 = arith.constant 0 : i32
    %c0_i32_0 = arith.constant 0 : i32
    %c0_i32_1 = arith.constant 0 : i32
    return %c0_i32, %c0_i32_0 : i32, i32
  }
  func.func @transform_4(%arg0: i32) -> i32 {
    %c0_i32 = arith.constant 0 : i32
    %c0_i32_0 = arith.constant 0 : i32
    return %c0_i32 : i32
  }
  func.func @transform_5(%arg0: i32) -> (i32, i32) {
    %c0_i32 = arith.constant 0 : i32
    %c0_i32_0 = arith.constant 0 : i32
    return %arg0, %c0_i32 : i32, i32
  }
}

</mosaic_0001>

<llo_original>
// kernel: tpu_custom_call.1
$region0: #{tpu_custom_call.1}
  #allocation0 [shape = 'u32[]', space=smem, size = 0x4, offset = 0x4, fixed_abs, tag = 'smem constant byte address 0x4 - core index']
  #allocation1 [shape = 'u32[144,128]{1,0:T(1,128)}', space=vmem, size = 0x12000, scoped, tag = 'internal scratch']
  #allocation2 [shape = 'f32[1]{0:T(128)S(6)}', space=smem, size = 0x200, scoped, tag = 'scoped memory for tpu_custom_call.1']
  %s0 = inlined_call_operand.hbm [shape: f32[8,256], index: 0, kind: input, shape index: {}]
  %s1 = inlined_call_operand.vmem [shape: bf16[256,128], index: 1, kind: input, shape index: {}]
  %s2 = inlined_call_operand.vmem [shape: f32[1,128], index: 2, kind: input, shape index: {}]
  %s3 = inlined_call_operand.vmem [shape: f32[128,1], index: 3, kind: input, shape index: {}]
  %s4 = inlined_call_operand.<no memory space> [shape: f32[1], index: 4, kind: input, shape index: {}]
  %s5 = inlined_call_operand.vmem [shape: f32[8,1], index: 5, kind: output, shape index: {}]
  %s6 = sld [smem:[#allocation0]]
  $region68: #{tpu_custom_call.1} parent=0
    _
  %s8 = ssub.s32 1, %s6
  %s9 = scalar_select 0, %s8, %s6
  %10 = sst [smem:[#allocation2]] %s4
  $region1: #{tpu_custom_call.1} parent=0
    #allocation3 [shape = 'u8[131072]{0}', space=vmem, size = 0x20000, scoped, tag = 'input window, operand 0, single buffered']
    #allocation4 [shape = 's32[1]{0}', space=sflag, size = 0x4, scoped, tag = 'scoped memory for tpu_custom_call.1']
    #allocation5 [shape = 'u8[65536]{0}', space=vmem, size = 0x10000, scoped, tag = 'output window, operand 0, single buffered']
    %11 = vsyncpa [#allocation4], 0
    // Predicated region
    $region2: #{tpu_custom_call.1} parent=1 // pred_check
      _
    $region3: #{tpu_custom_call.1} parent=1 // pred_check_branch
      %13 = sbr.rel (0) target = $region5
    $region4: #{tpu_custom_call.1} parent=1 // pred_region
      %s15 = ssub.s32 4096, 256
      %16 = vsyncadd [#allocation4], %s15
      %s17 = sshll.u32 [#allocation3], 4
      %s18 = int_to_ptr.vmem [resolvable:$true] %s17
      %23 = dma.hbm_to_vmem [thread:$0]  %s0, 256, %s18, [#allocation4], 256, 256, 16
    $region5: #{tpu_custom_call.1} parent=1 // pred_fallthru
      _
    // Predicated region
    $region6: #{tpu_custom_call.1} parent=1 // pred_check
      _
    $region7: #{tpu_custom_call.1} parent=1 // pred_check_branch
      %25 = sbr.rel (0) target = $region9
    $region8: #{tpu_custom_call.1} parent=1 // pred_region
      _
    $region9: #{tpu_custom_call.1} parent=1 // pred_fallthru
      _
    // Predicated region
    $region10: #{tpu_custom_call.1} parent=1 // pred_check
      _
    $region11: #{tpu_custom_call.1} parent=1 // pred_check_branch
      %27 = sbr.rel (0) target = $region13
    $region12: #{tpu_custom_call.1} parent=1 // pred_region
      _
    $region13: #{tpu_custom_call.1} parent=1 // pred_fallthru
      _
    // Predicated region
    $region14: #{tpu_custom_call.1} parent=1 // pred_check
      _
    $region15: #{tpu_custom_call.1} parent=1 // pred_check_branch
      %29 = sbr.rel (0) target = $region17
    $region16: #{tpu_custom_call.1} parent=1 // pred_region
      _
    $region17: #{tpu_custom_call.1} parent=1 // pred_fallthru
      _
    // Predicated region
    $region18: #{tpu_custom_call.1} parent=1 // pred_check
      _
    $region19: #{tpu_custom_call.1} parent=1 // pred_check_branch
      %31 = sbr.rel (0) target = $region21
    $region20: #{tpu_custom_call.1} parent=1 // pred_region
      _
    $region21: #{tpu_custom_call.1} parent=1 // pred_fallthru
      _
    // Predicated region
    $region22: #{tpu_custom_call.1} parent=1 // pred_check
      _
    $region23: #{tpu_custom_call.1} parent=1 // pred_check_branch
      %33 = sbr.rel (0) target = $region25
    $region24: #{tpu_custom_call.1} parent=1 // pred_region
      %34 = dma.done [#allocation4], 4096
    $region25: #{tpu_custom_call.1} parent=1 // pred_fallthru
      _
    %v36 = vld [vmem:[%s1] sm:$0xf]
    %v37 = vld [vmem:[%s1 + $0x4] sm:$0xf]
    %v38 = vld [vmem:[%s1 + $0x8] sm:$0xf]
    %v39 = vld [vmem:[%s1 + $0xc] sm:$0xf]
    %v40 = vld [vmem:[%s1 + $0x10] sm:$0xf]
    %v41 = vld [vmem:[%s1 + $0x14] sm:$0xf]
    %v42 = vld [vmem:[%s1 + $0x18] sm:$0xf]
    %v43 = vld [vmem:[%s1 + $0x1c] sm:$0xf]
    %v44 = vld [vmem:[%s1 + $0x20] sm:$0xf]
    %v45 = vld [vmem:[%s1 + $0x24] sm:$0xf]
    %v46 = vld [vmem:[%s1 + $0x28] sm:$0xf]
    %v47 = vld [vmem:[%s1 + $0x2c] sm:$0xf]
    %v48 = vld [vmem:[%s1 + $0x30] sm:$0xf]
    %v49 = vld [vmem:[%s1 + $0x34] sm:$0xf]
    %v50 = vld [vmem:[%s1 + $0x38] sm:$0xf]
    %v51 = vld [vmem:[%s1 + $0x3c] sm:$0xf]
    %v52 = vld [vmem:[%s1 + $0x40] sm:$0xf]
    %v53 = vld [vmem:[%s1 + $0x44] sm:$0xf]
    %v54 = vld [vmem:[%s1 + $0x48] sm:$0xf]
    %v55 = vld [vmem:[%s1 + $0x4c] sm:$0xf]
    %v56 = vld [vmem:[%s1 + $0x50] sm:$0xf]
    %v57 = vld [vmem:[%s1 + $0x54] sm:$0xf]
    %v58 = vld [vmem:[%s1 + $0x58] sm:$0xf]
    %v59 = vld [vmem:[%s1 + $0x5c] sm:$0xf]
    %v60 = vld [vmem:[%s1 + $0x60] sm:$0xf]
    %v61 = vld [vmem:[%s1 + $0x64] sm:$0xf]
    %v62 = vld [vmem:[%s1 + $0x68] sm:$0xf]
    %v63 = vld [vmem:[%s1 + $0x6c] sm:$0xf]
    %v64 = vld [vmem:[%s1 + $0x70] sm:$0xf]
    %v65 = vld [vmem:[%s1 + $0x74] sm:$0xf]
    %v66 = vld [vmem:[%s1 + $0x78] sm:$0xf]
    %v67 = vld [vmem:[%s1 + $0x7c] sm:$0xf]
    %v68 = vld [vmem:[%s2] sm:$0x1]
    %v69 = vld [vmem:[%s3] sm:$0xff]
    %v70 = vld [vmem:[%s3 + $0x8] sm:$0xff]
    %v71 = vld [vmem:[%s3 + $0x10] sm:$0xff]
    %v72 = vld [vmem:[%s3 + $0x18] sm:$0xff]
    %v73 = vld [vmem:[%s3 + $0x20] sm:$0xff]
    %v74 = vld [vmem:[%s3 + $0x28] sm:$0xff]
    %v75 = vld [vmem:[%s3 + $0x30] sm:$0xff]
    %v76 = vld [vmem:[%s3 + $0x38] sm:$0xff]
    %v77 = vld [vmem:[%s3 + $0x40] sm:$0xff]
    %v78 = vld [vmem:[%s3 + $0x48] sm:$0xff]
    %v79 = vld [vmem:[%s3 + $0x50] sm:$0xff]
    %v80 = vld [vmem:[%s3 + $0x58] sm:$0xff]
    %v81 = vld [vmem:[%s3 + $0x60] sm:$0xff]
    %v82 = vld [vmem:[%s3 + $0x68] sm:$0xff]
    %v83 = vld [vmem:[%s3 + $0x70] sm:$0xff]
    %v84 = vld [vmem:[%s3 + $0x78] sm:$0xff]
    %s85 = sld [smem:[#allocation2]]
    %s86 = smul.u32 0, 2
    %s87 = smul.addr %s86, 8
    %s88 = scalar_lea.vmem [#allocation3], %s87
    %v89 = vld [vmem:[%s88] sm:$0xff]
    %v90 = vld [vmem:[%s88 + $0x8] sm:$0xff]
    %v91 = vld [vmem:[%s88 + $0x10] sm:$0xff]
    %v92 = vld [vmem:[%s88 + $0x18] sm:$0xff]
    %v93 = vld [vmem:[%s88 + $0x20] sm:$0xff]
    %v94 = vld [vmem:[%s88 + $0x28] sm:$0xff]
    %v95 = vld [vmem:[%s88 + $0x30] sm:$0xff]
    %v96 = vld [vmem:[%s88 + $0x38] sm:$0xff]
    %v97 = vld [vmem:[%s88 + $0x40] sm:$0xff]
    %v98 = vld [vmem:[%s88 + $0x48] sm:$0xff]
    %v99 = vld [vmem:[%s88 + $0x50] sm:$0xff]
    %v100 = vld [vmem:[%s88 + $0x58] sm:$0xff]
    %v101 = vld [vmem:[%s88 + $0x60] sm:$0xff]
    %v102 = vld [vmem:[%s88 + $0x68] sm:$0xff]
    %v103 = vld [vmem:[%s88 + $0x70] sm:$0xff]
    %v104 = vld [vmem:[%s88 + $0x78] sm:$0xff]
    %v105 = vld [vmem:[%s88 + $0x80] sm:$0xff]
    %v106 = vld [vmem:[%s88 + $0x88] sm:$0xff]
    %v107 = vld [vmem:[%s88 + $0x90] sm:$0xff]
    %v108 = vld [vmem:[%s88 + $0x98] sm:$0xff]
    %v109 = vld [vmem:[%s88 + $0xa0] sm:$0xff]
    %v110 = vld [vmem:[%s88 + $0xa8] sm:$0xff]
    %v111 = vld [vmem:[%s88 + $0xb0] sm:$0xff]
    %v112 = vld [vmem:[%s88 + $0xb8] sm:$0xff]
    %v113 = vld [vmem:[%s88 + $0xc0] sm:$0xff]
    %v114 = vld [vmem:[%s88 + $0xc8] sm:$0xff]
    %v115 = vld [vmem:[%s88 + $0xd0] sm:$0xff]
    %v116 = vld [vmem:[%s88 + $0xd8] sm:$0xff]
    %v117 = vld [vmem:[%s88 + $0xe0] sm:$0xff]
    %v118 = vld [vmem:[%s88 + $0xe8] sm:$0xff]
    %v119 = vld [vmem:[%s88 + $0xf0] sm:$0xff]
    %v120 = vld [vmem:[%s88 + $0xf8] sm:$0xff]
    %v121 = vpack.c.bf16 %v91, %v89
    %v122 = vpack.c.bf16 %v92, %v90
    %v123 = vpack.c.bf16 %v95, %v93
    %v124 = vpack.c.bf16 %v96, %v94
    %v125 = vpack.c.bf16 %v99, %v97
    %v126 = vpack.c.bf16 %v100, %v98
    %v127 = vpack.c.bf16 %v103, %v101
    %v128 = vpack.c.bf16 %v104, %v102
    %v129 = vpack.c.bf16 %v107, %v105
    %v130 = vpack.c.bf16 %v108, %v106
    %v131 = vpack.c.bf16 %v111, %v109
    %v132 = vpack.c.bf16 %v112, %v110
    %v133 = vpack.c.bf16 %v115, %v113
    %v134 = vpack.c.bf16 %v116, %v114
    %v135 = vpack.c.bf16 %v119, %v117
    %v136 = vpack.c.bf16 %v120, %v118
    %v138 = vlaneseq
    %v139 = vshrl.u32 %v138, 7
    %v140 = vsub.s32 0, %v139
    %v141 = vrot.slane %v68, %v140
    %v175 = vunpack.c.l.b16 %v36
    %v176 = vunpack.c.l.b16 %v37
    %v177 = vunpack.c.l.b16 %v38
    %v178 = vunpack.c.l.b16 %v39
    %v179 = vunpack.c.l.b16 %v40
    %v180 = vunpack.c.l.b16 %v41
    %v181 = vunpack.c.l.b16 %v42
    %v182 = vunpack.c.l.b16 %v43
    %v183 = vunpack.c.l.b16 %v44
    %v184 = vunpack.c.l.b16 %v45
    %v185 = vunpack.c.l.b16 %v46
    %v186 = vunpack.c.l.b16 %v47
    %v187 = vunpack.c.l.b16 %v48
    %v188 = vunpack.c.l.b16 %v49
    %v189 = vunpack.c.l.b16 %v50
    %v190 = vunpack.c.l.b16 %v51
    %v191 = vunpack.c.l.b16 %v52
    %v192 = vunpack.c.l.b16 %v53
    %v193 = vunpack.c.l.b16 %v54
    %v194 = vunpack.c.l.b16 %v55
    %v195 = vunpack.c.l.b16 %v56
    %v196 = vunpack.c.l.b16 %v57
    %v197 = vunpack.c.l.b16 %v58
    %v198 = vunpack.c.l.b16 %v59
    %v199 = vunpack.c.l.b16 %v60
    %v200 = vunpack.c.l.b16 %v61
    %v201 = vunpack.c.l.b16 %v62
    %v202 = vunpack.c.l.b16 %v63
    %v203 = vunpack.c.l.b16 %v64
    %v204 = vunpack.c.l.b16 %v65
    %v205 = vunpack.c.l.b16 %v66
    %v206 = vunpack.c.l.b16 %v67
    %v207 = vpack.c.b16 %v176, %v175
    %v208 = vpack.c.b16 %v178, %v177
    %v209 = vpack.c.b16 %v180, %v179
    %v210 = vpack.c.b16 %v182, %v181
    %v211 = vpack.c.b16 %v184, %v183
    %v212 = vpack.c.b16 %v186, %v185
    %v213 = vpack.c.b16 %v188, %v187
    %v214 = vpack.c.b16 %v190, %v189
    %v215 = vpack.c.b16 %v192, %v191
    %v216 = vpack.c.b16 %v194, %v193
    %v217 = vpack.c.b16 %v196, %v195
    %v218 = vpack.c.b16 %v198, %v197
    %v219 = vpack.c.b16 %v200, %v199
    %v220 = vpack.c.b16 %v202, %v201
    %v221 = vpack.c.b16 %v204, %v203
    %v222 = vpack.c.b16 %v206, %v205
    %239 = vmatprep.subr.bf16.mxu0 0
    %240 = vmatpush1.bf16.msra.mxu0 %v207
    %241 = vmatprep.subr.bf16.mxu0 0
    %242 = vmatpush1.bf16.msra.mxu0 %v208
    %243 = vmatprep.subr.bf16.mxu0 0
    %244 = vmatpush1.bf16.msra.mxu0 %v209
    %245 = vmatprep.subr.bf16.mxu0 0
    %246 = vmatpush1.bf16.msra.mxu0 %v210
    %247 = vmatprep.subr.bf16.mxu0 0
    %248 = vmatpush1.bf16.msra.mxu0 %v211
    %249 = vmatprep.subr.bf16.mxu0 0
    %250 = vmatpush1.bf16.msra.mxu0 %v212
    %251 = vmatprep.subr.bf16.mxu0 0
    %252 = vmatpush1.bf16.msra.mxu0 %v213
    %253 = vmatprep.subr.bf16.mxu0 0
    %254 = vmatpush1.bf16.msra.mxu0 %v214
    %255 = vmatprep.subr.bf16.mxu0 0
    %256 = vmatpush1.bf16.msra.mxu0 %v215
    %257 = vmatprep.subr.bf16.mxu0 0
    %258 = vmatpush1.bf16.msra.mxu0 %v216
    %259 = vmatprep.subr.bf16.mxu0 0
    %260 = vmatpush1.bf16.msra.mxu0 %v217
    %261 = vmatprep.subr.bf16.mxu0 0
    %262 = vmatpush1.bf16.msra.mxu0 %v218
    %263 = vmatprep.subr.bf16.mxu0 0
    %264 = vmatpush1.bf16.msra.mxu0 %v219
    %265 = vmatprep.subr.bf16.mxu0 0
    %266 = vmatpush1.bf16.msra.mxu0 %v220
    %267 = vmatprep.subr.bf16.mxu0 0
    %268 = vmatpush1.bf16.msra.mxu0 %v221
    %269 = vmatprep.subr.bf16.mxu0 0
    %270 = vmatpush1.bf16.msra.mxu0 %v222
    %271 = vmatprep.mubr.bf16.mxu0 %v122
    %272 = vmatmul.mubr.bf16.gmra.mrb[0].mxu0 %v121
    %v273 = vpop.f32.mrb[0].mxu0
    %v274 = vadd.f32 %v141, %v273
    %v275 = vpop.f32.mrb[0].mxu0
    %v276 = vpop.f32.mrb[0].mxu0
    %v277 = vadd.f32 %v141, %v276
    %v278 = vpop.f32.mrb[0].mxu0
    %279 = vmatprep.mubr.bf16.mxu0 %v124
    %280 = vmatmul.mubr.bf16.gmra.mrb[0].mxu0 %v123
    %v281 = vpop.f32.mrb[0].mxu0
    %v282 = vadd.f32 %v141, %v281
    %v283 = vpop.f32.mrb[0].mxu0
    %v284 = vpop.f32.mrb[0].mxu0
    %v285 = vadd.f32 %v141, %v284
    %v286 = vpop.f32.mrb[0].mxu0
    %287 = vmatprep.mubr.bf16.mxu0 %v126
    %288 = vmatmul.mubr.bf16.gmra.mrb[0].mxu0 %v125
    %v289 = vpop.f32.mrb[0].mxu0
    %v290 = vadd.f32 %v141, %v289
    %v291 = vpop.f32.mrb[0].mxu0
    %v292 = vpop.f32.mrb[0].mxu0
    %v293 = vadd.f32 %v141, %v292
    %v294 = vpop.f32.mrb[0].mxu0
    %295 = vmatprep.mubr.bf16.mxu0 %v128
    %296 = vmatmul.mubr.bf16.gmra.mrb[0].mxu0 %v127
    %v297 = vpop.f32.mrb[0].mxu0
    %v298 = vadd.f32 %v141, %v297
    %v299 = vpop.f32.mrb[0].mxu0
    %v300 = vpop.f32.mrb[0].mxu0
    %v301 = vadd.f32 %v141, %v300
    %v302 = vpop.f32.mrb[0].mxu0
    %303 = vmatprep.mubr.bf16.mxu0 %v130
    %304 = vmatmul.mubr.bf16.gmra.mrb[0].mxu0 %v129
    %v305 = vpop.f32.mrb[0].mxu0
    %v306 = vadd.f32 %v141, %v305
    %v307 = vpop.f32.mrb[0].mxu0
    %v308 = vpop.f32.mrb[0].mxu0
    %v309 = vadd.f32 %v141, %v308
    %v310 = vpop.f32.mrb[0].mxu0
    %311 = vmatprep.mubr.bf16.mxu0 %v132
    %312 = vmatmul.mubr.bf16.gmra.mrb[0].mxu0 %v131
    %v313 = vpop.f32.mrb[0].mxu0
    %v314 = vadd.f32 %v141, %v313
    %v315 = vpop.f32.mrb[0].mxu0
    %v316 = vpop.f32.mrb[0].mxu0
    %v317 = vadd.f32 %v141, %v316
    %v318 = vpop.f32.mrb[0].mxu0
    %319 = vmatprep.mubr.bf16.mxu0 %v134
    %320 = vmatmul.mubr.bf16.gmra.mrb[0].mxu0 %v133
    %v321 = vpop.f32.mrb[0].mxu0
    %v322 = vadd.f32 %v141, %v321
    %v323 = vpop.f32.mrb[0].mxu0
    %v324 = vpop.f32.mrb[0].mxu0
    %v325 = vadd.f32 %v141, %v324
    %v326 = vpop.f32.mrb[0].mxu0
    %327 = vmatprep.mubr.bf16.mxu0 %v136
    %328 = vmatmul.mubr.bf16.gmra.mrb[0].mxu0 %v135
    %v329 = vpop.f32.mrb[0].mxu0
    %v330 = vadd.f32 %v141, %v329
    %v331 = vpop.f32.mrb[0].mxu0
    %v332 = vpop.f32.mrb[0].mxu0
    %v333 = vadd.f32 %v141, %v332
    %v334 = vpop.f32.mrb[0].mxu0
    %335 = vdwg.mxu0
    %v336 = vmax.f32 %v274, 0.0
    %v337 = vmax.f32 %v277, 0.0
    %v338 = vmax.f32 %v282, 0.0
    %v339 = vmax.f32 %v285, 0.0
    %v340 = vmax.f32 %v290, 0.0
    %v341 = vmax.f32 %v293, 0.0
    %v342 = vmax.f32 %v298, 0.0
    %v343 = vmax.f32 %v301, 0.0
    %v344 = vmax.f32 %v306, 0.0
    %v345 = vmax.f32 %v309, 0.0
    %v346 = vmax.f32 %v314, 0.0
    %v347 = vmax.f32 %v317, 0.0
    %v348 = vmax.f32 %v322, 0.0
    %v349 = vmax.f32 %v325, 0.0
    %v350 = vmax.f32 %v330, 0.0
    %v351 = vmax.f32 %v333, 0.0
    %v352 = vstv %s85
    %353 = vmatprep.subr.mxu0 0.0
    %354 = vmatpush1.msra.mxu0 %v69
    %355 = vmatprep.subr.mxu0 0.0
    %356 = vmatpush1.msra.mxu0 %v70
    %357 = vmatprep.subr.mxu0 0.0
    %358 = vmatpush1.msra.mxu0 %v71
    %359 = vmatprep.subr.mxu0 0.0
    %360 = vmatpush1.msra.mxu0 %v72
    %361 = vmatprep.subr.mxu0 0.0
    %362 = vmatpush1.msra.mxu0 %v73
    %363 = vmatprep.subr.mxu0 0.0
    %364 = vmatpush1.msra.mxu0 %v74
    %365 = vmatprep.subr.mxu0 0.0
    %366 = vmatpush1.msra.mxu0 %v75
    %367 = vmatprep.subr.mxu0 0.0
    %368 = vmatpush1.msra.mxu0 %v76
    %369 = vmatprep.subr.mxu0 0.0
    %370 = vmatpush1.msra.mxu0 %v77
    %371 = vmatprep.subr.mxu0 0.0
    %372 = vmatpush1.msra.mxu0 %v78
    %373 = vmatprep.subr.mxu0 0.0
    %374 = vmatpush1.msra.mxu0 %v79
    %375 = vmatprep.subr.mxu0 0.0
    %376 = vmatpush1.msra.mxu0 %v80
    %377 = vmatprep.subr.mxu0 0.0
    %378 = vmatpush1.msra.mxu0 %v81
    %379 = vmatprep.subr.mxu0 0.0
    %380 = vmatpush1.msra.mxu0 %v82
    %381 = vmatprep.subr.mxu0 0.0
    %382 = vmatpush1.msra.mxu0 %v83
    %383 = vmatprep.subr.mxu0 0.0
    %384 = vmatpush1.msra.mxu0 %v84
    %385 = vmatprep.subr.mxu0 0.0
    %386 = vmatpush1.msra.mxu0 0.0
    %387 = vmatprep.subr.mxu0 0.0
    %388 = vmatpush1.msra.mxu0 0.0
    %389 = vmatprep.subr.mxu0 0.0
    %390 = vmatpush1.msra.mxu0 0.0
    %391 = vmatprep.subr.mxu0 0.0
    %392 = vmatpush1.msra.mxu0 0.0
    %393 = vmatprep.subr.mxu0 0.0
    %394 = vmatpush1.msra.mxu0 0.0
    %395 = vmatprep.subr.mxu0 0.0
    %396 = vmatpush1.msra.mxu0 0.0
    %397 = vmatprep.subr.mxu0 0.0
    %398 = vmatpush1.msra.mxu0 0.0
    %399 = vmatprep.subr.mxu0 0.0
    %400 = vmatpush1.msra.mxu0 0.0
    %401 = vmatprep.subr.mxu0 0.0
    %402 = vmatpush1.msra.mxu0 0.0
    %403 = vmatprep.subr.mxu0 0.0
    %404 = vmatpush1.msra.mxu0 0.0
    %405 = vmatprep.subr.mxu0 0.0
    %406 = vmatpush1.msra.mxu0 0.0
    %407 = vmatprep.subr.mxu0 0.0
    %408 = vmatpush1.msra.mxu0 0.0
    %409 = vmatprep.subr.mxu0 0.0
    %410 = vmatpush1.msra.mxu0 0.0
    %411 = vmatprep.subr.mxu0 0.0
    %412 = vmatpush1.msra.mxu0 0.0
    %413 = vmatprep.subr.mxu0 0.0
    %414 = vmatpush1.msra.mxu0 0.0
    %415 = vmatprep.subr.mxu0 0.0
    %416 = vmatpush1.msra.mxu0 0.0
    %417 = vmatprep.mubr.f32.mxu0 0.0
    %418 = vmatmul.mubr.f32.gmra.mrb[0].mxu0 %v336
    %v419 = vpop.f32.mrb[0].mxu0
    %v420 = vadd.f32 %v352, %v419
    %v421 = vpop.f32.mrb[0].mxu0
    %422 = vmatprep.mubr.f32.mxu0 0.0
    %423 = vmatmul.mubr.f32.gmra.mrb[0].mxu0 %v337
    %v424 = vpop.f32.mrb[0].mxu0
    %v425 = vadd.f32 %v352, %v424
    %v426 = vpop.f32.mrb[0].mxu0
    %427 = vmatprep.mubr.f32.mxu0 0.0
    %428 = vmatmul.mubr.f32.gmra.mrb[0].mxu0 %v338
    %v429 = vpop.f32.mrb[0].mxu0
    %v430 = vadd.f32 %v352, %v429
    %v431 = vpop.f32.mrb[0].mxu0
    %432 = vmatprep.mubr.f32.mxu0 0.0
    %433 = vmatmul.mubr.f32.gmra.mrb[0].mxu0 %v339
    %v434 = vpop.f32.mrb[0].mxu0
    %v435 = vadd.f32 %v352, %v434
    %v436 = vpop.f32.mrb[0].mxu0
    %437 = vmatprep.mubr.f32.mxu0 0.0
    %438 = vmatmul.mubr.f32.gmra.mrb[0].mxu0 %v340
    %v439 = vpop.f32.mrb[0].mxu0
    %v440 = vadd.f32 %v352, %v439
    %v441 = vpop.f32.mrb[0].mxu0
    %442 = vmatprep.mubr.f32.mxu0 0.0
    %443 = vmatmul.mubr.f32.gmra.mrb[0].mxu0 %v341
    %v444 = vpop.f32.mrb[0].mxu0
    %v445 = vadd.f32 %v352, %v444
    %v446 = vpop.f32.mrb[0].mxu0
    %447 = vmatprep.mubr.f32.mxu0 0.0
    %448 = vmatmul.mubr.f32.gmra.mrb[0].mxu0 %v342
    %v449 = vpop.f32.mrb[0].mxu0
    %v450 = vadd.f32 %v352, %v449
    %v451 = vpop.f32.mrb[0].mxu0
    %452 = vmatprep.mubr.f32.mxu0 0.0
    %453 = vmatmul.mubr.f32.gmra.mrb[0].mxu0 %v343
    %v454 = vpop.f32.mrb[0].mxu0
    %v455 = vadd.f32 %v352, %v454
    %v456 = vpop.f32.mrb[0].mxu0
    %457 = vmatprep.mubr.f32.mxu0 0.0
    %458 = vmatmul.mubr.f32.gmra.mrb[0].mxu0 %v344
    %v459 = vpop.f32.mrb[0].mxu0
    %v460 = vadd.f32 %v352, %v459
    %v461 = vpop.f32.mrb[0].mxu0
    %462 = vmatprep.mubr.f32.mxu0 0.0
    %463 = vmatmul.mubr.f32.gmra.mrb[0].mxu0 %v345
    %v464 = vpop.f32.mrb[0].mxu0
    %v465 = vadd.f32 %v352, %v464
    %v466 = vpop.f32.mrb[0].mxu0
    %467 = vmatprep.mubr.f32.mxu0 0.0
    %468 = vmatmul.mubr.f32.gmra.mrb[0].mxu0 %v346
    %v469 = vpop.f32.mrb[0].mxu0
    %v470 = vadd.f32 %v352, %v469
    %v471 = vpop.f32.mrb[0].mxu0
    %472 = vmatprep.mubr.f32.mxu0 0.0
    %473 = vmatmul.mubr.f32.gmra.mrb[0].mxu0 %v347
    %v474 = vpop.f32.mrb[0].mxu0
    %v475 = vadd.f32 %v352, %v474
    %v476 = vpop.f32.mrb[0].mxu0
    %477 = vmatprep.mubr.f32.mxu0 0.0
    %478 = vmatmul.mubr.f32.gmra.mrb[0].mxu0 %v348
    %v479 = vpop.f32.mrb[0].mxu0
    %v480 = vadd.f32 %v352, %v479
    %v481 = vpop.f32.mrb[0].mxu0
    %482 = vmatprep.mubr.f32.mxu0 0.0
    %483 = vmatmul.mubr.f32.gmra.mrb[0].mxu0 %v349
    %v484 = vpop.f32.mrb[0].mxu0
    %v485 = vadd.f32 %v352, %v484
    %v486 = vpop.f32.mrb[0].mxu0
    %487 = vmatprep.mubr.f32.mxu0 0.0
    %488 = vmatmul.mubr.f32.gmra.mrb[0].mxu0 %v350
    %v489 = vpop.f32.mrb[0].mxu0
    %v490 = vadd.f32 %v352, %v489
    %v491 = vpop.f32.mrb[0].mxu0
    %492 = vmatprep.mubr.f32.mxu0 0.0
    %493 = vmatmul.mubr.f32.gmra.mrb[0].mxu0 %v351
    %v494 = vpop.f32.mrb[0].mxu0
    %v495 = vadd.f32 %v352, %v494
    %v496 = vpop.f32.mrb[0].mxu0
    %497 = vdwg.mxu0
    %v498 = vmul.f32 %v420, 0.5
    %v499 = vmul.f32 %v425, 0.5
    %v500 = vmul.f32 %v430, 0.5
    %v501 = vmul.f32 %v435, 0.5
    %v502 = vmul.f32 %v440, 0.5
    %v503 = vmul.f32 %v445, 0.5
    %v504 = vmul.f32 %v450, 0.5
    %v505 = vmul.f32 %v455, 0.5
    %v506 = vmul.f32 %v460, 0.5
    %v507 = vmul.f32 %v465, 0.5
    %v508 = vmul.f32 %v470, 0.5
    %v509 = vmul.f32 %v475, 0.5
    %v510 = vmul.f32 %v480, 0.5
    %v511 = vmul.f32 %v485, 0.5
    %v512 = vmul.f32 %v490, 0.5
    %v513 = vmul.f32 %v495, 0.5
    %v514 = vtanh.pop %v498
    %v515 = vtanh.pop %v499
    %v516 = vtanh.pop %v500
    %v517 = vtanh.pop %v501
    %v518 = vtanh.pop %v502
    %v519 = vtanh.pop %v503
    %v520 = vtanh.pop %v504
    %v521 = vtanh.pop %v505
    %v522 = vtanh.pop %v506
    %v523 = vtanh.pop %v507
    %v524 = vtanh.pop %v508
    %v525 = vtanh.pop %v509
    %v526 = vtanh.pop %v510
    %v527 = vtanh.pop %v511
    %v528 = vtanh.pop %v512
    %v529 = vtanh.pop %v513
    %v530 = vadd.f32 %v514, 1.0
    %v531 = vadd.f32 %v515, 1.0
    %v532 = vadd.f32 %v516, 1.0
    %v533 = vadd.f32 %v517, 1.0
    %v534 = vadd.f32 %v518, 1.0
    %v535 = vadd.f32 %v519, 1.0
    %v536 = vadd.f32 %v520, 1.0
    %v537 = vadd.f32 %v521, 1.0
    %v538 = vadd.f32 %v522, 1.0
    %v539 = vadd.f32 %v523, 1.0
    %v540 = vadd.f32 %v524, 1.0
    %v541 = vadd.f32 %v525, 1.0
    %v542 = vadd.f32 %v526, 1.0
    %v543 = vadd.f32 %v527, 1.0
    %v544 = vadd.f32 %v528, 1.0
    %v545 = vadd.f32 %v529, 1.0
    %v546 = vmul.f32 %v530, 0.5
    %v547 = vmul.f32 %v531, 0.5
    %v548 = vmul.f32 %v532, 0.5
    %v549 = vmul.f32 %v533, 0.5
    %v550 = vmul.f32 %v534, 0.5
    %v551 = vmul.f32 %v535, 0.5
    %v552 = vmul.f32 %v536, 0.5
    %v553 = vmul.f32 %v537, 0.5
    %v554 = vmul.f32 %v538, 0.5
    %v555 = vmul.f32 %v539, 0.5
    %v556 = vmul.f32 %v540, 0.5
    %v557 = vmul.f32 %v541, 0.5
    %v558 = vmul.f32 %v542, 0.5
    %v559 = vmul.f32 %v543, 0.5
    %v560 = vmul.f32 %v544, 0.5
    %v561 = vmul.f32 %v545, 0.5
    %vm562 = vcmask 7168
    %563 = vst.msk [vmem:[#allocation5] sm:$0xff] %vm562, %v546
    %564 = vst.msk [vmem:[#allocation5 + $0x8] sm:$0xff] %vm562, %v547
    %565 = vst.msk [vmem:[#allocation5 + $0x10] sm:$0xff] %vm562, %v548
    %566 = vst.msk [vmem:[#allocation5 + $0x18] sm:$0xff] %vm562, %v549
    %567 = vst.msk [vmem:[#allocation5 + $0x20] sm:$0xff] %vm562, %v550
    %568 = vst.msk [vmem:[#allocation5 + $0x28] sm:$0xff] %vm562, %v551
    %569 = vst.msk [vmem:[#allocation5 + $0x30] sm:$0xff] %vm562, %v552
    %570 = vst.msk [vmem:[#allocation5 + $0x38] sm:$0xff] %vm562, %v553
    %571 = vst.msk [vmem:[#allocation5 + $0x40] sm:$0xff] %vm562, %v554
    %572 = vst.msk [vmem:[#allocation5 + $0x48] sm:$0xff] %vm562, %v555
    %573 = vst.msk [vmem:[#allocation5 + $0x50] sm:$0xff] %vm562, %v556
    %574 = vst.msk [vmem:[#allocation5 + $0x58] sm:$0xff] %vm562, %v557
    %575 = vst.msk [vmem:[#allocation5 + $0x60] sm:$0xff] %vm562, %v558
    %576 = vst.msk [vmem:[#allocation5 + $0x68] sm:$0xff] %vm562, %v559
    %577 = vst.msk [vmem:[#allocation5 + $0x70] sm:$0xff] %vm562, %v560
    %578 = vst.msk [vmem:[#allocation5 + $0x78] sm:$0xff] %vm562, %v561
    // Predicated region
    $region26: #{tpu_custom_call.1} parent=1 // pred_check
      _
    $region27: #{tpu_custom_call.1} parent=1 // pred_check_branch
      %580 = sbr.rel (0) target = $region29
    $region28: #{tpu_custom_call.1} parent=1 // pred_region
      // Predicated region
      $region30: #{tpu_custom_call.1} parent=28 // pred_check
        _
      $region31: #{tpu_custom_call.1} parent=28 // pred_check_branch
        %582 = sbr.rel (0) target = $region33
      $region32: #{tpu_custom_call.1} parent=28 // pred_region
        // Predicated region
        $region34: #{tpu_custom_call.1} parent=32 // pred_check
          _
        $region35: #{tpu_custom_call.1} parent=32 // pred_check_branch
          %584 = sbr.rel (0) target = $region37
        $region36: #{tpu_custom_call.1} parent=32 // pred_region
          // Predicated region
          $region49: #{tpu_custom_call.1} parent=36 // pred_check
            _
          $region50: #{tpu_custom_call.1} parent=36 // pred_check_branch
            %599 = sbr.rel (0) target = $region52
          $region51: #{tpu_custom_call.1} parent=36 // pred_region
            loop: start=0, step=1, limit=1
            $region53: #{tpu_custom_call.1} parent=51 // loop_pre_header
              _
            $region54: #{tpu_custom_call.1} parent=51 // loop_header
              %s601 = sphi 0, %s605
              %p602 = scmp.ge.s32.totalorder %s601, 1
              %s606 = sphi [#allocation5], [#allocation5]
              %s607 = sphi %s5, %s5
            $region55: #{tpu_custom_call.1} parent=51 // loop_header_branch
              %604 = sbr.rel (%p602) target = $region59
            $region56: #{tpu_custom_call.1} parent=51 // loop_body
              %v608 = vld [vmem:[%s606] sm:$0xff]
              %609 = vst [vmem:[%s607] sm:$0xff] %v608
            $region57: #{tpu_custom_call.1} parent=51 // loop_footer
              %s605 = sadd.s32 1, %s601
            $region58: #{tpu_custom_call.1} parent=51 // loop_footer_branch
              %600 = sbr.rel target = $region54
            $region59: #{tpu_custom_call.1} parent=51 // loop_exit
              _
          $region52: #{tpu_custom_call.1} parent=36 // pred_fallthru
            _
          // Predicated region
          $region60: #{tpu_custom_call.1} parent=36 // pred_check
            _
          $region61: #{tpu_custom_call.1} parent=36 // pred_check_branch
            %611 = sbr.rel target = $region63
          $region62: #{tpu_custom_call.1} parent=36 // pred_region
            _
          $region63: #{tpu_custom_call.1} parent=36 // pred_fallthru
            _
        $region37: #{tpu_custom_call.1} parent=32 // pred_fallthru
          _
        // Predicated region
        $region38: #{tpu_custom_call.1} parent=32 // pred_check
          _
        $region39: #{tpu_custom_call.1} parent=32 // pred_check_branch
          %586 = sbr.rel target = $region41
        $region40: #{tpu_custom_call.1} parent=32 // pred_region
          loop: start=0, step=1, limit=1
          $region42: #{tpu_custom_call.1} parent=40 // loop_pre_header
            _
          $region43: #{tpu_custom_call.1} parent=40 // loop_header
            %s589 = sphi 0, %s593
            %p590 = scmp.ge.s32.totalorder %s589, 1
            %s594 = sphi [#allocation5], [#allocation5]
            %s595 = sphi %s5, %s5
          $region44: #{tpu_custom_call.1} parent=40 // loop_header_branch
            %592 = sbr.rel (%p590) target = $region48
          $region45: #{tpu_custom_call.1} parent=40 // loop_body
            %v596 = vld [vmem:[%s594] sm:$0xff]
            %597 = vst [vmem:[%s595] sm:$0xff] %v596
          $region46: #{tpu_custom_call.1} parent=40 // loop_footer
            %s593 = sadd.s32 1, %s589
          $region47: #{tpu_custom_call.1} parent=40 // loop_footer_branch
            %588 = sbr.rel target = $region43
          $region48: #{tpu_custom_call.1} parent=40 // loop_exit
            _
        $region41: #{tpu_custom_call.1} parent=32 // pred_fallthru
          _
      $region33: #{tpu_custom_call.1} parent=28 // pred_fallthru
        _
      %612 = vnop
    $region29: #{tpu_custom_call.1} parent=1 // pred_fallthru
      _
    // Predicated region
    $region64: #{tpu_custom_call.1} parent=1 // pred_check
      _
    $region65: #{tpu_custom_call.1} parent=1 // pred_check_branch
      %614 = sbr.rel (0) target = $region67
    $region66: #{tpu_custom_call.1} parent=1 // pred_region
      _
    $region67: #{tpu_custom_call.1} parent=1 // pred_fallthru
      _
    %615 = vsyncpa [#allocation4], 1

</llo_original>
